<compile_context>
chip_gen: v5e
topology: v5e:2x2
jax: 0.10.0
libtpu: 0.0.40
codegen_flags: <defaults>
</compile_context>

<pallas_src>
import jax
import jax.numpy as jnp
from jax.experimental import pallas as pl
from jax.experimental.pallas import tpu as pltpu


# ---------------------------------------------------------------------------
# Padded layout constants
# ---------------------------------------------------------------------------
IO_P = 128                    # padded (obs_dim + z_dim) width
H_P = 256                     # padded hidden width (150 -> 256)
C_P = 128                     # padded code width
OUT_W = IO_P + 2 * C_P        # output slab lanes: [ dec | mu | logvar ]  (384)

# weight-blob row offsets (every weight shares the 256-lane output width)
OFF_E1 = 0                    # [IO_P, H_P]   enc linear 1
OFF_E2 = OFF_E1 + IO_P        # [H_P,  H_P]   enc linear 2
OFF_HD = OFF_E2 + H_P         # [H_P,  H_P]   fused heads: mu | logvar
OFF_D1 = OFF_HD + H_P         # [C_P,  H_P]   dec linear 1
OFF_D2 = OFF_D1 + C_P         # [H_P,  H_P]   dec linear 2
OFF_D3 = OFF_D2 + H_P         # [H_P,  H_P]   dec linear 3 (io_dim real lanes)
W_ROWS = OFF_D3 + H_P         # 1280
B_ROWS = 8                    # bias blob rows (6 used, sublane-padded to 8)

TB_LARGE = 512                # large-batch tile rows (sweepable 512-1024)


def _round_up(x, m):
    return ((x + m - 1) // m) * m


def _choose_tiling(B):
    """Return (tile_rows, padded_batch)."""
    if B <= 128:
        tb = _round_up(max(B, 8), 8)
        return tb, tb
    if B <= 2 * TB_LARGE:
        # Split into exactly 2 "parallel" programs so both v7x TensorCores work.
        tb = _round_up((B + 1) // 2, 8)
        return tb, 2 * tb
    return TB_LARGE, _round_up(B, TB_LARGE)


# ---------------------------------------------------------------------------
# Pallas kernel: full VAE forward on one batch tile
# ---------------------------------------------------------------------------
def vae_forward_kernel(x_ref, eps_ref, w_ref, b_ref, out_ref):
    cdt = w_ref.dtype  # matmul operand dtype: bf16 (prod) or f32 (debug path)

    def pad_lanes(a, width):
        # zero-pad the lane dim to a 128-multiple (static widths)
        if a.shape[1] == width:
            return a
        fill = jnp.zeros((a.shape[0], width - a.shape[1]), a.dtype)
        return jnp.concatenate([a, fill], axis=1)

    def dense(a, w_off, w_rows, b_row):
        y = jnp.dot(a.astype(cdt), w_ref[w_off:w_off + w_rows, :],
                    preferred_element_type=jnp.float32)
        return y + b_ref[b_row:b_row + 1, :]

    # Raw inputs, zero-padded to lane-dense widths in-VMEM (no wrapper slab pack).
    x = pad_lanes(x_ref[...].astype(jnp.float32), IO_P)       # [TB, 128]
    eps = pad_lanes(eps_ref[...].astype(jnp.float32), C_P)    # [TB, 128], pad lanes 0

    # ---- encoder: Linear -> ReLU -> Linear -> ReLU ----
    h = jnp.maximum(dense(x, OFF_E1, IO_P, 0), 0.0)
    h = jnp.maximum(dense(h, OFF_E2, H_P, 1), 0.0)

    # ---- fused heads: [ mu | logvar ] in one matmul ----
    heads = dense(h, OFF_HD, H_P, 2)                           # [TB, 256]
    mu = heads[:, :C_P]
    logvar = heads[:, C_P:]
    stds = jnp.exp(0.5 * logvar)

    # ---- reparameterization (padded lanes: eps=0, mu=0 -> code=0) ----
    code = eps * stds + mu

    # ---- decoder: Linear -> ReLU -> Linear -> ReLU -> Linear ----
    d = jnp.maximum(dense(code, OFF_D1, C_P, 3), 0.0)
    d = jnp.maximum(dense(d, OFF_D2, H_P, 4), 0.0)
    dec = dense(d, OFF_D3, H_P, 5)

    # ---- lane-dense output slab: [ dec | mu | logvar ], two 128-aligned stores ----
    out_ref[:, :IO_P] = dec[:, :IO_P]
    out_ref[:, IO_P:] = heads


# ---------------------------------------------------------------------------
# Wrapper
# ---------------------------------------------------------------------------
def vae_forward(obs_z, epsilon, packed):
    B, io_dim = obs_z.shape
    code_dim = epsilon.shape[1]
    assert io_dim <= IO_P and code_dim <= C_P

    TB, B_pad = _choose_tiling(B)

    x = obs_z.astype(jnp.float32)
    eps = epsilon.astype(jnp.float32)
    if B_pad != B:
        # Only pads the tiny raw inputs (io_dim/code_dim lanes), and only when
        # B is not already tile-aligned.
        x = jnp.pad(x, ((0, B_pad - B), (0, 0)))
        eps = jnp.pad(eps, ((0, B_pad - B), (0, 0)))

    grid = (B_pad // TB,)

    out_slab = pl.pallas_call(
        vae_forward_kernel,
        out_shape=jax.ShapeDtypeStruct((B_pad, OUT_W), jnp.float32),
        grid_spec=pltpu.PrefetchScalarGridSpec(
            num_scalar_prefetch=0,
            grid=grid,
            in_specs=[
                pl.BlockSpec((TB, io_dim), lambda i: (i, 0)),     # obs_z (raw)
                pl.BlockSpec((TB, code_dim), lambda i: (i, 0)),   # epsilon (raw)
                pl.BlockSpec((W_ROWS, H_P), lambda i: (0, 0)),    # weight blob (resident)
                pl.BlockSpec((B_ROWS, H_P), lambda i: (0, 0)),    # bias blob (resident)
            ],
            out_specs=pl.BlockSpec((TB, OUT_W), lambda i: (i, 0)),
        ),
        compiler_params=pltpu.CompilerParams(
            dimension_semantics=("parallel",),
            # Headroom for 512-1024 row tiles; covers v5e's 16 MiB default.
            vmem_limit_bytes=32 * 1024 * 1024),
    )(x, eps, packed["w"], packed["b"])

    # Padded batch rows (if any) carry garbage; always slice to :B.
    out = out_slab[:B, :io_dim]
    mu = out_slab[:B, IO_P:IO_P + code_dim]
    logvar = out_slab[:B, IO_P + C_P:IO_P + C_P + code_dim]
    stds = jnp.exp(0.5 * logvar)   # recomputed (kernel no longer streams it out)
    return out, mu, logvar, stds


# ---------------------------------------------------------------------------
# Parameter init (shapes follow VAE.make_networks, hidden=150) + packing
# ---------------------------------------------------------------------------
def init_params(key, obs_dim, z_dim, code_dim, hidden=150):
    io_dim = obs_dim + z_dim

    def linear(k, fan_in, fan_out):
        kw, kb = jax.random.split(k)
        scale = 1.0 / jnp.sqrt(jnp.float32(fan_in))
        w = jax.random.uniform(kw, (fan_in, fan_out), jnp.float32, -scale, scale)
        b = jax.random.uniform(kb, (1, fan_out), jnp.float32, -scale, scale)
        return w, b

    keys = jax.random.split(key, 8)
    p = {}
    p["w_e1"], p["b_e1"] = linear(keys[0], io_dim, hidden)
    p["w_e2"], p["b_e2"] = linear(keys[1], hidden, hidden)
    p["w_mu"], p["b_mu"] = linear(keys[2], hidden, code_dim)
    p["w_lv"], p["b_lv"] = linear(keys[3], hidden, code_dim)
    p["w_d1"], p["b_d1"] = linear(keys[4], code_dim, hidden)
    p["w_d2"], p["b_d2"] = linear(keys[5], hidden, hidden)
    p["w_d3"], p["b_d3"] = linear(keys[6], hidden, io_dim)
    return p


def pack_params(p, obs_dim, z_dim, code_dim, hidden=150, weight_dtype=jnp.bfloat16):
    """Zero-pad every layer to lane-dense widths and pack into two blobs.

    Weight blob: [W_ROWS, 256] in `weight_dtype` (bf16 by default for MXU
    throughput; pass jnp.float32 for the exact-debug path).
    Bias blob:   [8, 256] f32 (one row per layer; padded lanes are zero so padded
    activations stay exactly zero through ReLU / Linear and never leak).
    """
    io_dim = obs_dim + z_dim
    assert io_dim <= IO_P and hidden <= H_P and code_dim <= C_P

    w = jnp.zeros((W_ROWS, H_P), jnp.float32)
    b = jnp.zeros((B_ROWS, H_P), jnp.float32)

    w = w.at[OFF_E1:OFF_E1 + io_dim, :hidden].set(p["w_e1"])
    b = b.at[0, :hidden].set(p["b_e1"][0])

    w = w.at[OFF_E2:OFF_E2 + hidden, :hidden].set(p["w_e2"])
    b = b.at[1, :hidden].set(p["b_e2"][0])

    # fused heads: mu -> lanes [0, code_dim), logvar -> lanes [C_P, C_P+code_dim)
    w = w.at[OFF_HD:OFF_HD + hidden, :code_dim].set(p["w_mu"])
    w = w.at[OFF_HD:OFF_HD + hidden, C_P:C_P + code_dim].set(p["w_lv"])
    b = b.at[2, :code_dim].set(p["b_mu"][0])
    b = b.at[2, C_P:C_P + code_dim].set(p["b_lv"][0])

    w = w.at[OFF_D1:OFF_D1 + code_dim, :hidden].set(p["w_d1"])
    b = b.at[3, :hidden].set(p["b_d1"][0])

    w = w.at[OFF_D2:OFF_D2 + hidden, :hidden].set(p["w_d2"])
    b = b.at[4, :hidden].set(p["b_d2"][0])

    w = w.at[OFF_D3:OFF_D3 + hidden, :io_dim].set(p["w_d3"])
    b = b.at[5, :io_dim].set(p["b_d3"][0])

    return {"w": w.astype(weight_dtype), "b": b}


# ---------------------------------------------------------------------------
# Pure-JAX reference (for correctness checks)
# ---------------------------------------------------------------------------
def vae_forward_ref(obs_z, epsilon, p):
    h = jnp.maximum(obs_z @ p["w_e1"] + p["b_e1"], 0.0)
    h = jnp.maximum(h @ p["w_e2"] + p["b_e2"], 0.0)
    mu = h @ p["w_mu"] + p["b_mu"]
    logvar = h @ p["w_lv"] + p["b_lv"]
    stds = jnp.exp(0.5 * logvar)
    code = epsilon * stds + mu
    d = jnp.maximum(code @ p["w_d1"] + p["b_d1"], 0.0)
    d = jnp.maximum(d @ p["w_d2"] + p["b_d2"], 0.0)
    out = d @ p["w_d3"] + p["b_d3"]
    return out, mu, logvar, stds


if __name__ == "__main__":
    # Small shapes consistent with the module's forward:
    #   obs_z: [B, obs_dim + z_dim], epsilon: [B, code_dim]
    B, obs_dim, z_dim, code_dim = 8, 20, 12, 16

    key = jax.random.PRNGKey(0)
    k_obs, k_eps, k_par = jax.random.split(key, 3)

    obs_z = jax.random.normal(k_obs, (B, obs_dim + z_dim), jnp.float32)
    epsilon = jax.random.normal(k_eps, (B, code_dim), jnp.float32)
    params = init_params(k_par, obs_dim, z_dim, code_dim)

    # Reference (f32).
    r_out, r_mu, r_lv, r_std = vae_forward_ref(obs_z, epsilon, params)

    # ---- f32 debug path: exact-semantics check at 1e-4 ----
    packed_f32 = pack_params(params, obs_dim, z_dim, code_dim,
                             weight_dtype=jnp.float32)
    out, mu, logvar, stds = vae_forward(obs_z, epsilon, packed_f32)
    jax.block_until_ready((out, mu, logvar, stds))
    assert jnp.allclose(out, r_out, atol=1e-4, rtol=1e-4)
    assert jnp.allclose(mu, r_mu, atol=1e-4, rtol=1e-4)
    assert jnp.allclose(logvar, r_lv, atol=1e-4, rtol=1e-4)
    assert jnp.allclose(stds, r_std, atol=1e-4, rtol=1e-4)

    # ---- bf16 production path: bf16 operands, f32 accumulation (loose check) ----
    packed_bf16 = pack_params(params, obs_dim, z_dim, code_dim)   # bf16 weights
    out_b, mu_b, lv_b, std_b = vae_forward(obs_z, epsilon, packed_bf16)
    jax.block_until_ready((out_b, mu_b, lv_b, std_b))
    assert jnp.allclose(out_b, r_out, atol=5e-2, rtol=5e-2)
    assert jnp.allclose(mu_b, r_mu, atol=5e-2, rtol=5e-2)
    assert jnp.allclose(lv_b, r_lv, atol=5e-2, rtol=5e-2)
    assert jnp.allclose(std_b, r_std, atol=5e-2, rtol=5e-2)

    print("KERNEL_OK")
</pallas_src>

<mosaic_0001>
module attributes {stable_mosaic.version = 11 : i64} {
  func.func @vae_forward_kernel(%arg0: i32, %arg1: memref<8x32xf32, #tpu.memory_space<vmem>>, %arg2: memref<8x16xf32, #tpu.memory_space<vmem>>, %arg3: memref<1280x256xf32, #tpu.memory_space<vmem>>, %arg4: memref<8x256xf32, #tpu.memory_space<vmem>>, %arg5: memref<8x384xf32, #tpu.memory_space<vmem>>) attributes {dimension_semantics = [#tpu.dimension_semantics<parallel>], iteration_bounds = array<i64: 1>, scalar_prefetch = 0 : i64, scratch_operands = 0 : i64, tpu.core_type = #tpu.core_type<tc>, window_params = [{transform_indices = @transform_0, window_bounds = array<i64: 8, 32>}, {transform_indices = @transform_1, window_bounds = array<i64: 8, 16>}, {pipeline_mode = #tpu.pipeline_mode<synchronous>, transform_indices = @transform_2, window_bounds = array<i64: 1280, 256>}, {pipeline_mode = #tpu.pipeline_mode<synchronous>, transform_indices = @transform_3, window_bounds = array<i64: 8, 256>}, {transform_indices = @transform_4, window_bounds = array<i64: 8, 384>}]} {
    %c0 = arith.constant 0 : index
    %c0_0 = arith.constant 0 : index
    %0 = vector.load %arg1[%c0, %c0_0] : memref<8x32xf32, #tpu.memory_space<vmem>>, vector<8x32xf32>
    %cst = arith.constant 0.000000e+00 : f32
    %1 = vector.broadcast %cst : f32 to vector<8x96xf32>
    %2 = tpu.concatenate %0, %1 in 1 : vector<8x32xf32>, vector<8x96xf32> -> vector<8x128xf32>
    %c0_1 = arith.constant 0 : index
    %c0_2 = arith.constant 0 : index
    %3 = vector.load %arg2[%c0_1, %c0_2] : memref<8x16xf32, #tpu.memory_space<vmem>>, vector<8x16xf32>
    %cst_3 = arith.constant 0.000000e+00 : f32
    %4 = vector.broadcast %cst_3 : f32 to vector<8x112xf32>
    %5 = tpu.concatenate %3, %4 in 1 : vector<8x16xf32>, vector<8x112xf32> -> vector<8x128xf32>
    %c0_4 = arith.constant 0 : index
    %c0_5 = arith.constant 0 : index
    %6 = vector.load %arg3[%c0_4, %c0_5] : memref<1280x256xf32, #tpu.memory_space<vmem>>, vector<128x256xf32>
    %cst_6 = arith.constant dense<0.000000e+00> : vector<8x256xf32>
    %7 = tpu.matmul %2, %6, %cst_6 {dimension_numbers = #tpu.dot_dimension_numbers<[1], [0], [0], [1], [0, 0, 1, 1], [], []>} : vector<8x128xf32>, vector<128x256xf32>, vector<8x256xf32> -> vector<8x256xf32>
    %c0_7 = arith.constant 0 : index
    %c0_8 = arith.constant 0 : index
    %8 = vector.load %arg4[%c0_7, %c0_8] : memref<8x256xf32, #tpu.memory_space<vmem>>, vector<1x256xf32>
    %9 = vector.broadcast %8 : vector<1x256xf32> to vector<8x256xf32>
    %10 = arith.addf %7, %9 : vector<8x256xf32>
    %cst_9 = arith.constant 0.000000e+00 : f32
    %11 = vector.broadcast %cst_9 : f32 to vector<8x256xf32>
    %12 = arith.maximumf %10, %11 : vector<8x256xf32>
    %c128 = arith.constant 128 : index
    %c0_10 = arith.constant 0 : index
    %13 = vector.load %arg3[%c128, %c0_10] : memref<1280x256xf32, #tpu.memory_space<vmem>>, vector<256x256xf32>
    %cst_11 = arith.constant dense<0.000000e+00> : vector<8x256xf32>
    %14 = tpu.matmul %12, %13, %cst_11 {dimension_numbers = #tpu.dot_dimension_numbers<[1], [0], [0], [1], [0, 0, 1, 1], [], []>} : vector<8x256xf32>, vector<256x256xf32>, vector<8x256xf32> -> vector<8x256xf32>
    %c1 = arith.constant 1 : index
    %c0_12 = arith.constant 0 : index
    %15 = vector.load %arg4[%c1, %c0_12] : memref<8x256xf32, #tpu.memory_space<vmem>>, vector<1x256xf32>
    %16 = vector.broadcast %15 : vector<1x256xf32> to vector<8x256xf32>
    %17 = arith.addf %14, %16 : vector<8x256xf32>
    %cst_13 = arith.constant 0.000000e+00 : f32
    %18 = vector.broadcast %cst_13 : f32 to vector<8x256xf32>
    %19 = arith.maximumf %17, %18 : vector<8x256xf32>
    %c384 = arith.constant 384 : index
    %c0_14 = arith.constant 0 : index
    %20 = vector.load %arg3[%c384, %c0_14] : memref<1280x256xf32, #tpu.memory_space<vmem>>, vector<256x256xf32>
    %cst_15 = arith.constant dense<0.000000e+00> : vector<8x256xf32>
    %21 = tpu.matmul %19, %20, %cst_15 {dimension_numbers = #tpu.dot_dimension_numbers<[1], [0], [0], [1], [0, 0, 1, 1], [], []>} : vector<8x256xf32>, vector<256x256xf32>, vector<8x256xf32> -> vector<8x256xf32>
    %c2 = arith.constant 2 : index
    %c0_16 = arith.constant 0 : index
    %22 = vector.load %arg4[%c2, %c0_16] : memref<8x256xf32, #tpu.memory_space<vmem>>, vector<1x256xf32>
    %23 = vector.broadcast %22 : vector<1x256xf32> to vector<8x256xf32>
    %24 = arith.addf %21, %23 : vector<8x256xf32>
    %25 = vector.extract_strided_slice %24 {offsets = [0, 0], sizes = [8, 128], strides = [1, 1]} : vector<8x256xf32> to vector<8x128xf32>
    %26 = vector.extract_strided_slice %24 {offsets = [0, 128], sizes = [8, 128], strides = [1, 1]} : vector<8x256xf32> to vector<8x128xf32>
    %cst_17 = arith.constant 5.000000e-01 : f32
    %27 = vector.broadcast %cst_17 : f32 to vector<8x128xf32>
    %28 = arith.mulf %27, %26 : vector<8x128xf32>
    %29 = math.exp %28 : vector<8x128xf32>
    %30 = arith.mulf %5, %29 : vector<8x128xf32>
    %31 = arith.addf %30, %25 : vector<8x128xf32>
    %c640 = arith.constant 640 : index
    %c0_18 = arith.constant 0 : index
    %32 = vector.load %arg3[%c640, %c0_18] : memref<1280x256xf32, #tpu.memory_space<vmem>>, vector<128x256xf32>
    %cst_19 = arith.constant dense<0.000000e+00> : vector<8x256xf32>
    %33 = tpu.matmul %31, %32, %cst_19 {dimension_numbers = #tpu.dot_dimension_numbers<[1], [0], [0], [1], [0, 0, 1, 1], [], []>} : vector<8x128xf32>, vector<128x256xf32>, vector<8x256xf32> -> vector<8x256xf32>
    %c3 = arith.constant 3 : index
    %c0_20 = arith.constant 0 : index
    %34 = vector.load %arg4[%c3, %c0_20] : memref<8x256xf32, #tpu.memory_space<vmem>>, vector<1x256xf32>
    %35 = vector.broadcast %34 : vector<1x256xf32> to vector<8x256xf32>
    %36 = arith.addf %33, %35 : vector<8x256xf32>
    %cst_21 = arith.constant 0.000000e+00 : f32
    %37 = vector.broadcast %cst_21 : f32 to vector<8x256xf32>
    %38 = arith.maximumf %36, %37 : vector<8x256xf32>
    %c768 = arith.constant 768 : index
    %c0_22 = arith.constant 0 : index
    %39 = vector.load %arg3[%c768, %c0_22] : memref<1280x256xf32, #tpu.memory_space<vmem>>, vector<256x256xf32>
    %cst_23 = arith.constant dense<0.000000e+00> : vector<8x256xf32>
    %40 = tpu.matmul %38, %39, %cst_23 {dimension_numbers = #tpu.dot_dimension_numbers<[1], [0], [0], [1], [0, 0, 1, 1], [], []>} : vector<8x256xf32>, vector<256x256xf32>, vector<8x256xf32> -> vector<8x256xf32>
    %c4 = arith.constant 4 : index
    %c0_24 = arith.constant 0 : index
    %41 = vector.load %arg4[%c4, %c0_24] : memref<8x256xf32, #tpu.memory_space<vmem>>, vector<1x256xf32>
    %42 = vector.broadcast %41 : vector<1x256xf32> to vector<8x256xf32>
    %43 = arith.addf %40, %42 : vector<8x256xf32>
    %cst_25 = arith.constant 0.000000e+00 : f32
    %44 = vector.broadcast %cst_25 : f32 to vector<8x256xf32>
    %45 = arith.maximumf %43, %44 : vector<8x256xf32>
    %c1024 = arith.constant 1024 : index
    %c0_26 = arith.constant 0 : index
    %46 = vector.load %arg3[%c1024, %c0_26] : memref<1280x256xf32, #tpu.memory_space<vmem>>, vector<256x256xf32>
    %cst_27 = arith.constant dense<0.000000e+00> : vector<8x256xf32>
    %47 = tpu.matmul %45, %46, %cst_27 {dimension_numbers = #tpu.dot_dimension_numbers<[1], [0], [0], [1], [0, 0, 1, 1], [], []>} : vector<8x256xf32>, vector<256x256xf32>, vector<8x256xf32> -> vector<8x256xf32>
    %c5 = arith.constant 5 : index
    %c0_28 = arith.constant 0 : index
    %48 = vector.load %arg4[%c5, %c0_28] : memref<8x256xf32, #tpu.memory_space<vmem>>, vector<1x256xf32>
    %49 = vector.broadcast %48 : vector<1x256xf32> to vector<8x256xf32>
    %50 = arith.addf %47, %49 : vector<8x256xf32>
    %51 = vector.extract_strided_slice %50 {offsets = [0, 0], sizes = [8, 128], strides = [1, 1]} : vector<8x256xf32> to vector<8x128xf32>
    %c0_29 = arith.constant 0 : index
    %c0_30 = arith.constant 0 : index
    %52 = vector.load %arg5[%c0_29, %c0_30] : memref<8x384xf32, #tpu.memory_space<vmem>>, vector<8x128xf32>
    tpu.vector_store %arg5[%c0_29, %c0_30], %51 {strides = array<i32>} : memref<8x384xf32, #tpu.memory_space<vmem>>, vector<8x128xf32>,
    %c0_31 = arith.constant 0 : index
    %c128_32 = arith.constant 128 : index
    %53 = vector.load %arg5[%c0_31, %c128_32] : memref<8x384xf32, #tpu.memory_space<vmem>>, vector<8x256xf32>
    tpu.vector_store %arg5[%c0_31, %c128_32], %24 {strides = array<i32>} : memref<8x384xf32, #tpu.memory_space<vmem>>, vector<8x256xf32>,
    return
  }
  func.func @transform_0(%arg0: i32) -> (i32, i32) {
    %c0_i32 = arith.constant 0 : i32
    %c0_i32_0 = arith.constant 0 : i32
    return %arg0, %c0_i32 : i32, i32
  }
  func.func @transform_1(%arg0: i32) -> (i32, i32) {
    %c0_i32 = arith.constant 0 : i32
    %c0_i32_0 = arith.constant 0 : i32
    return %arg0, %c0_i32 : i32, i32
  }
  func.func @transform_2(%arg0: i32) -> (i32, i32) {
    %c0_i32 = arith.constant 0 : i32
    %c0_i32_0 = arith.constant 0 : i32
    %c0_i32_1 = arith.constant 0 : i32
    return %c0_i32, %c0_i32_0 : i32, i32
  }
  func.func @transform_3(%arg0: i32) -> (i32, i32) {
    %c0_i32 = arith.constant 0 : i32
    %c0_i32_0 = arith.constant 0 : i32
    %c0_i32_1 = arith.constant 0 : i32
    return %c0_i32, %c0_i32_0 : i32, i32
  }
  func.func @transform_4(%arg0: i32) -> (i32, i32) {
    %c0_i32 = arith.constant 0 : i32
    %c0_i32_0 = arith.constant 0 : i32
    return %arg0, %c0_i32 : i32, i32
  }
}

</mosaic_0001>

<llo_original>
// kernel: tpu_custom_call.1
$region0: #{tpu_custom_call.1}
  #allocation0 [shape = 'u32[]', space=smem, size = 0x4, offset = 0x4, fixed_abs, tag = 'smem constant byte address 0x4 - core index']
  #allocation1 [shape = 'u32[72,128]{1,0:T(1,128)}', space=vmem, size = 0x9000, scoped, tag = 'internal scratch']
  %s0 = inlined_call_operand.hbm [shape: f32[8,32], index: 0, kind: input, shape index: {}]
  %s1 = inlined_call_operand.hbm [shape: f32[8,16], index: 1, kind: input, shape index: {}]
  %s2 = inlined_call_operand.hbm [shape: f32[1280,256], index: 2, kind: input, shape index: {}]
  %s3 = inlined_call_operand.hbm [shape: f32[8,256], index: 3, kind: input, shape index: {}]
  %s4 = inlined_call_operand.hbm [shape: f32[8,384], index: 4, kind: output, shape index: {}]
  %s5 = sld [smem:[#allocation0]]
  $region42: #{tpu_custom_call.1} parent=0
    _
  %s7 = ssub.s32 1, %s5
  %s8 = scalar_select 0, %s7, %s5
  $region1: #{tpu_custom_call.1} parent=0
    #allocation2 [shape = 'u8[4096]{0}', space=vmem, size = 0x1000, scoped, tag = 'input window, operand 0, single buffered']
    #allocation3 [shape = 's32[1]{0}', space=sflag, size = 0x4, scoped, tag = 'scoped memory for tpu_custom_call.1']
    #allocation4 [shape = 's32[1]{0}', space=sflag, size = 0x4, scoped, tag = 'scoped memory for tpu_custom_call.1']
    #allocation5 [shape = 'u8[4096]{0}', space=vmem, size = 0x1000, scoped, tag = 'input window, operand 1, single buffered']
    #allocation6 [shape = 's32[1]{0}', space=sflag, size = 0x4, scoped, tag = 'scoped memory for tpu_custom_call.1']
    #allocation7 [shape = 'u8[1310720]{0}', space=vmem, size = 0x140000, scoped, tag = 'input window, operand 2, single buffered']
    #allocation8 [shape = 'u8[8192]{0}', space=vmem, size = 0x2000, scoped, tag = 'input window, operand 3, single buffered']
    #allocation9 [shape = 's32[1]{0}', space=sflag, size = 0x4, scoped, tag = 'scoped memory for tpu_custom_call.1']
    #allocation10 [shape = 'u8[12288]{0}', space=vmem, size = 0x3000, scoped, tag = 'output window, operand 0, single buffered']
    %9 = vsyncpa [#allocation3], 0
    %10 = vsyncpa [#allocation6], 0
    %11 = vsyncpa [#allocation9], 0
    %12 = vsyncpa [#allocation4], 0
    // Predicated region
    $region2: #{tpu_custom_call.1} parent=1 // pred_check
      _
    $region3: #{tpu_custom_call.1} parent=1 // pred_check_branch
      %14 = sbr.rel (0) target = $region5
    $region4: #{tpu_custom_call.1} parent=1 // pred_region
      %16 = vsyncadd [#allocation3], 0
      %s18 = sshll.u32 %s0, 4
      %s19 = int_to_ptr.hbm [resolvable:$true] %s18
      %s20 = sshll.u32 [#allocation2], 4
      %s21 = int_to_ptr.vmem [resolvable:$true] %s20
      %23 = dma.hbm_to_vmem [thread:$0]  %s19, 128, %s21, [#allocation3]
    $region5: #{tpu_custom_call.1} parent=1 // pred_fallthru
      _
    // Predicated region
    $region6: #{tpu_custom_call.1} parent=1 // pred_check
      _
    $region7: #{tpu_custom_call.1} parent=1 // pred_check_branch
      %25 = sbr.rel (0) target = $region9
    $region8: #{tpu_custom_call.1} parent=1 // pred_region
      %27 = vsyncadd [#allocation6], 0
      %s29 = sshll.u32 %s1, 4
      %s30 = int_to_ptr.hbm [resolvable:$true] %s29
      %s31 = sshll.u32 [#allocation5], 4
      %s32 = int_to_ptr.vmem [resolvable:$true] %s31
      %34 = dma.hbm_to_vmem [thread:$0]  %s30, 128, %s32, [#allocation6]
    $region9: #{tpu_custom_call.1} parent=1 // pred_fallthru
      _
    // Predicated region
    $region10: #{tpu_custom_call.1} parent=1 // pred_check
      _
    $region11: #{tpu_custom_call.1} parent=1 // pred_check_branch
      %36 = sbr.rel (0) target = $region13
    $region12: #{tpu_custom_call.1} parent=1 // pred_region
      %38 = vsyncadd [#allocation6], 0
      %s39 = sshll.u32 %s2, 4
      %s40 = int_to_ptr.hbm [resolvable:$true] %s39
      %s41 = sshll.u32 [#allocation7], 4
      %s42 = int_to_ptr.vmem [resolvable:$true] %s41
      %47 = dma.hbm_to_vmem [thread:$0]  %s40, 40960, %s42, [#allocation6], 256, 256, 16
    $region13: #{tpu_custom_call.1} parent=1 // pred_fallthru
      _
    // Predicated region
    $region14: #{tpu_custom_call.1} parent=1 // pred_check
      _
    $region15: #{tpu_custom_call.1} parent=1 // pred_check_branch
      %49 = sbr.rel (0) target = $region17
    $region16: #{tpu_custom_call.1} parent=1 // pred_region
      %51 = vsyncadd [#allocation9], 0
      %s53 = sshll.u32 %s3, 4
      %s54 = int_to_ptr.hbm [resolvable:$true] %s53
      %s55 = sshll.u32 [#allocation8], 4
      %s56 = int_to_ptr.vmem [resolvable:$true] %s55
      %58 = dma.hbm_to_vmem [thread:$0]  %s54, 256, %s56, [#allocation9]
    $region17: #{tpu_custom_call.1} parent=1 // pred_fallthru
      _
    // Predicated region
    $region18: #{tpu_custom_call.1} parent=1 // pred_check
      _
    $region19: #{tpu_custom_call.1} parent=1 // pred_check_branch
      %60 = sbr.rel (0) target = $region21
    $region20: #{tpu_custom_call.1} parent=1 // pred_region
      %62 = dma.done [#allocation3], 128
    $region21: #{tpu_custom_call.1} parent=1 // pred_fallthru
      _
    // Predicated region
    $region22: #{tpu_custom_call.1} parent=1 // pred_check
      _
    $region23: #{tpu_custom_call.1} parent=1 // pred_check_branch
      %64 = sbr.rel (0) target = $region25
    $region24: #{tpu_custom_call.1} parent=1 // pred_region
      %66 = dma.done [#allocation6], 128
    $region25: #{tpu_custom_call.1} parent=1 // pred_fallthru
      _
    // Predicated region
    $region26: #{tpu_custom_call.1} parent=1 // pred_check
      _
    $region27: #{tpu_custom_call.1} parent=1 // pred_check_branch
      %68 = sbr.rel (0) target = $region29
    $region28: #{tpu_custom_call.1} parent=1 // pred_region
      %70 = dma.done [#allocation6], 40960
    $region29: #{tpu_custom_call.1} parent=1 // pred_fallthru
      _
    // Predicated region
    $region30: #{tpu_custom_call.1} parent=1 // pred_check
      _
    $region31: #{tpu_custom_call.1} parent=1 // pred_check_branch
      %72 = sbr.rel (0) target = $region33
    $region32: #{tpu_custom_call.1} parent=1 // pred_region
      %74 = dma.done [#allocation9], 256
    $region33: #{tpu_custom_call.1} parent=1 // pred_fallthru
      _
    %v75 = vld [vmem:[#allocation2] sm:$0xff]
    %vm76 = vcmask 261120
    %v77 = vsel %vm76, %v75, 0.0
    %v78 = vld [vmem:[#allocation5] sm:$0xff]
    %vm79 = vcmask 130048
    %v80 = vsel %vm79, %v78, 0.0
    %v81 = vld [vmem:[#allocation7] sm:$0xff]
    %v82 = vld [vmem:[#allocation7 + $0x8] sm:$0xff]
    %v83 = vld [vmem:[#allocation7 + $0x10] sm:$0xff]
    %v84 = vld [vmem:[#allocation7 + $0x18] sm:$0xff]
    %v85 = vld [vmem:[#allocation7 + $0x20] sm:$0xff]
    %v86 = vld [vmem:[#allocation7 + $0x28] sm:$0xff]
    %v87 = vld [vmem:[#allocation7 + $0x30] sm:$0xff]
    %v88 = vld [vmem:[#allocation7 + $0x38] sm:$0xff]
    %v89 = vld [vmem:[#allocation7 + $0x40] sm:$0xff]
    %v90 = vld [vmem:[#allocation7 + $0x48] sm:$0xff]
    %v91 = vld [vmem:[#allocation7 + $0x50] sm:$0xff]
    %v92 = vld [vmem:[#allocation7 + $0x58] sm:$0xff]
    %v93 = vld [vmem:[#allocation7 + $0x60] sm:$0xff]
    %v94 = vld [vmem:[#allocation7 + $0x68] sm:$0xff]
    %v95 = vld [vmem:[#allocation7 + $0x70] sm:$0xff]
    %v96 = vld [vmem:[#allocation7 + $0x78] sm:$0xff]
    %v97 = vld [vmem:[#allocation7 + $0x80] sm:$0xff]
    %v98 = vld [vmem:[#allocation7 + $0x88] sm:$0xff]
    %v99 = vld [vmem:[#allocation7 + $0x90] sm:$0xff]
    %v100 = vld [vmem:[#allocation7 + $0x98] sm:$0xff]
    %v101 = vld [vmem:[#allocation7 + $0xa0] sm:$0xff]
    %v102 = vld [vmem:[#allocation7 + $0xa8] sm:$0xff]
    %v103 = vld [vmem:[#allocation7 + $0xb0] sm:$0xff]
    %v104 = vld [vmem:[#allocation7 + $0xb8] sm:$0xff]
    %v105 = vld [vmem:[#allocation7 + $0xc0] sm:$0xff]
    %v106 = vld [vmem:[#allocation7 + $0xc8] sm:$0xff]
    %v107 = vld [vmem:[#allocation7 + $0xd0] sm:$0xff]
    %v108 = vld [vmem:[#allocation7 + $0xd8] sm:$0xff]
    %v109 = vld [vmem:[#allocation7 + $0xe0] sm:$0xff]
    %v110 = vld [vmem:[#allocation7 + $0xe8] sm:$0xff]
    %v111 = vld [vmem:[#allocation7 + $0xf0] sm:$0xff]
    %v112 = vld [vmem:[#allocation7 + $0xf8] sm:$0xff]
    %v113 = vld [vmem:[#allocation8] ss:$8 sm:$0x3]
    %v115 = vperm.slane %v113, 0
    %v116 = vperm.slane %v113, 1
    %119 = vmatpush.msra.mxu0 %v111
    %120 = vmatpush.msra.mxu0 %v109
    %121 = vmatpush.msra.mxu0 %v107
    %122 = vmatpush.msra.mxu0 %v105
    %123 = vmatpush.msra.mxu0 %v103
    %124 = vmatpush.msra.mxu0 %v101
    %125 = vmatpush.msra.mxu0 %v99
    %126 = vmatpush.msra.mxu0 %v97
    %127 = vmatpush.msra.mxu0 %v95
    %128 = vmatpush.msra.mxu0 %v93
    %129 = vmatpush.msra.mxu0 %v91
    %130 = vmatpush.msra.mxu0 %v89
    %131 = vmatpush.msra.mxu0 %v87
    %132 = vmatpush.msra.mxu0 %v85
    %133 = vmatpush.msra.mxu0 %v83
    %134 = vmatpush.msra.mxu0 %v81
    %135 = vmatmul.f32.gmra.mxu0 %v77
    %v136 = vpop.f32.mrf.mxu0
    %v137 = vadd.f32 %v115, %v136
    %138 = vdwg.mxu0
    %139 = vmatpush.msra.mxu0 %v112
    %140 = vmatpush.msra.mxu0 %v110
    %141 = vmatpush.msra.mxu0 %v108
    %142 = vmatpush.msra.mxu0 %v106
    %143 = vmatpush.msra.mxu0 %v104
    %144 = vmatpush.msra.mxu0 %v102
    %145 = vmatpush.msra.mxu0 %v100
    %146 = vmatpush.msra.mxu0 %v98
    %147 = vmatpush.msra.mxu0 %v96
    %148 = vmatpush.msra.mxu0 %v94
    %149 = vmatpush.msra.mxu0 %v92
    %150 = vmatpush.msra.mxu0 %v90
    %151 = vmatpush.msra.mxu0 %v88
    %152 = vmatpush.msra.mxu0 %v86
    %153 = vmatpush.msra.mxu0 %v84
    %154 = vmatpush.msra.mxu0 %v82
    %155 = vmatmul.f32.gmra.mxu0 %v77
    %v156 = vpop.f32.mrf.mxu0
    %v157 = vadd.f32 %v116, %v156
    %158 = vdwg.mxu0
    %v159 = vmax.f32 %v137, 0.0
    %v160 = vmax.f32 %v157, 0.0
    %v161 = vld [vmem:[#allocation7 + $0x100] sm:$0xff]
    %v162 = vld [vmem:[#allocation7 + $0x108] sm:$0xff]
    %v163 = vld [vmem:[#allocation7 + $0x110] sm:$0xff]
    %v164 = vld [vmem:[#allocation7 + $0x118] sm:$0xff]
    %v165 = vld [vmem:[#allocation7 + $0x120] sm:$0xff]
    %v166 = vld [vmem:[#allocation7 + $0x128] sm:$0xff]
    %v167 = vld [vmem:[#allocation7 + $0x130] sm:$0xff]
    %v168 = vld [vmem:[#allocation7 + $0x138] sm:$0xff]
    %v169 = vld [vmem:[#allocation7 + $0x140] sm:$0xff]
    %v170 = vld [vmem:[#allocation7 + $0x148] sm:$0xff]
    %v171 = vld [vmem:[#allocation7 + $0x150] sm:$0xff]
    %v172 = vld [vmem:[#allocation7 + $0x158] sm:$0xff]
    %v173 = vld [vmem:[#allocation7 + $0x160] sm:$0xff]
    %v174 = vld [vmem:[#allocation7 + $0x168] sm:$0xff]
    %v175 = vld [vmem:[#allocation7 + $0x170] sm:$0xff]
    %v176 = vld [vmem:[#allocation7 + $0x178] sm:$0xff]
    %v177 = vld [vmem:[#allocation7 + $0x180] sm:$0xff]
    %v178 = vld [vmem:[#allocation7 + $0x188] sm:$0xff]
    %v179 = vld [vmem:[#allocation7 + $0x190] sm:$0xff]
    %v180 = vld [vmem:[#allocation7 + $0x198] sm:$0xff]
    %v181 = vld [vmem:[#allocation7 + $0x1a0] sm:$0xff]
    %v182 = vld [vmem:[#allocation7 + $0x1a8] sm:$0xff]
    %v183 = vld [vmem:[#allocation7 + $0x1b0] sm:$0xff]
    %v184 = vld [vmem:[#allocation7 + $0x1b8] sm:$0xff]
    %v185 = vld [vmem:[#allocation7 + $0x1c0] sm:$0xff]
    %v186 = vld [vmem:[#allocation7 + $0x1c8] sm:$0xff]
    %v187 = vld [vmem:[#allocation7 + $0x1d0] sm:$0xff]
    %v188 = vld [vmem:[#allocation7 + $0x1d8] sm:$0xff]
    %v189 = vld [vmem:[#allocation7 + $0x1e0] sm:$0xff]
    %v190 = vld [vmem:[#allocation7 + $0x1e8] sm:$0xff]
    %v191 = vld [vmem:[#allocation7 + $0x1f0] sm:$0xff]
    %v192 = vld [vmem:[#allocation7 + $0x1f8] sm:$0xff]
    %v193 = vld [vmem:[#allocation7 + $0x200] sm:$0xff]
    %v194 = vld [vmem:[#allocation7 + $0x208] sm:$0xff]
    %v195 = vld [vmem:[#allocation7 + $0x210] sm:$0xff]
    %v196 = vld [vmem:[#allocation7 + $0x218] sm:$0xff]
    %v197 = vld [vmem:[#allocation7 + $0x220] sm:$0xff]
    %v198 = vld [vmem:[#allocation7 + $0x228] sm:$0xff]
    %v199 = vld [vmem:[#allocation7 + $0x230] sm:$0xff]
    %v200 = vld [vmem:[#allocation7 + $0x238] sm:$0xff]
    %v201 = vld [vmem:[#allocation7 + $0x240] sm:$0xff]
    %v202 = vld [vmem:[#allocation7 + $0x248] sm:$0xff]
    %v203 = vld [vmem:[#allocation7 + $0x250] sm:$0xff]
    %v204 = vld [vmem:[#allocation7 + $0x258] sm:$0xff]
    %v205 = vld [vmem:[#allocation7 + $0x260] sm:$0xff]
    %v206 = vld [vmem:[#allocation7 + $0x268] sm:$0xff]
    %v207 = vld [vmem:[#allocation7 + $0x270] sm:$0xff]
    %v208 = vld [vmem:[#allocation7 + $0x278] sm:$0xff]
    %v209 = vld [vmem:[#allocation7 + $0x280] sm:$0xff]
    %v210 = vld [vmem:[#allocation7 + $0x288] sm:$0xff]
    %v211 = vld [vmem:[#allocation7 + $0x290] sm:$0xff]
    %v212 = vld [vmem:[#allocation7 + $0x298] sm:$0xff]
    %v213 = vld [vmem:[#allocation7 + $0x2a0] sm:$0xff]
    %v214 = vld [vmem:[#allocation7 + $0x2a8] sm:$0xff]
    %v215 = vld [vmem:[#allocation7 + $0x2b0] sm:$0xff]
    %v216 = vld [vmem:[#allocation7 + $0x2b8] sm:$0xff]
    %v217 = vld [vmem:[#allocation7 + $0x2c0] sm:$0xff]
    %v218 = vld [vmem:[#allocation7 + $0x2c8] sm:$0xff]
    %v219 = vld [vmem:[#allocation7 + $0x2d0] sm:$0xff]
    %v220 = vld [vmem:[#allocation7 + $0x2d8] sm:$0xff]
    %v221 = vld [vmem:[#allocation7 + $0x2e0] sm:$0xff]
    %v222 = vld [vmem:[#allocation7 + $0x2e8] sm:$0xff]
    %v223 = vld [vmem:[#allocation7 + $0x2f0] sm:$0xff]
    %v224 = vld [vmem:[#allocation7 + $0x2f8] sm:$0xff]
    %s225 = scalar_lea.vmem [#allocation8], 1
    %v226 = vld [vmem:[%s225] ss:$8 sm:$0x3]
    %v228 = vperm.slane %v226, 0
    %v229 = vperm.slane %v226, 1
    %232 = vmatpush.msra.mxu0 %v191
    %233 = vmatpush.msra.mxu0 %v189
    %234 = vmatpush.msra.mxu0 %v187
    %235 = vmatpush.msra.mxu0 %v185
    %236 = vmatpush.msra.mxu0 %v183
    %237 = vmatpush.msra.mxu0 %v181
    %238 = vmatpush.msra.mxu0 %v179
    %239 = vmatpush.msra.mxu0 %v177
    %240 = vmatpush.msra.mxu0 %v175
    %241 = vmatpush.msra.mxu0 %v173
    %242 = vmatpush.msra.mxu0 %v171
    %243 = vmatpush.msra.mxu0 %v169
    %244 = vmatpush.msra.mxu0 %v167
    %245 = vmatpush.msra.mxu0 %v165
    %246 = vmatpush.msra.mxu0 %v163
    %247 = vmatpush.msra.mxu0 %v161
    %248 = vmatmul.f32.gmra.mxu0 %v159
    %v249 = vpop.f32.mrf.mxu0
    %v250 = vadd.f32 %v228, %v249
    %251 = vdwg.mxu0
    %252 = vmatpush.msra.mxu0 %v223
    %253 = vmatpush.msra.mxu0 %v221
    %254 = vmatpush.msra.mxu0 %v219
    %255 = vmatpush.msra.mxu0 %v217
    %256 = vmatpush.msra.mxu0 %v215
    %257 = vmatpush.msra.mxu0 %v213
    %258 = vmatpush.msra.mxu0 %v211
    %259 = vmatpush.msra.mxu0 %v209
    %260 = vmatpush.msra.mxu0 %v207
    %261 = vmatpush.msra.mxu0 %v205
    %262 = vmatpush.msra.mxu0 %v203
    %263 = vmatpush.msra.mxu0 %v201
    %264 = vmatpush.msra.mxu0 %v199
    %265 = vmatpush.msra.mxu0 %v197
    %266 = vmatpush.msra.mxu0 %v195
    %267 = vmatpush.msra.mxu0 %v193
    %268 = vmatmul.f32.gmra.mxu0 %v160
    %v269 = vpop.f32.mrf.mxu0
    %v270 = vadd.f32 %v250, %v269
    %271 = vdwg.mxu0
    %272 = vmatpush.msra.mxu0 %v192
    %273 = vmatpush.msra.mxu0 %v190
    %274 = vmatpush.msra.mxu0 %v188
    %275 = vmatpush.msra.mxu0 %v186
    %276 = vmatpush.msra.mxu0 %v184
    %277 = vmatpush.msra.mxu0 %v182
    %278 = vmatpush.msra.mxu0 %v180
    %279 = vmatpush.msra.mxu0 %v178
    %280 = vmatpush.msra.mxu0 %v176
    %281 = vmatpush.msra.mxu0 %v174
    %282 = vmatpush.msra.mxu0 %v172
    %283 = vmatpush.msra.mxu0 %v170
    %284 = vmatpush.msra.mxu0 %v168
    %285 = vmatpush.msra.mxu0 %v166
    %286 = vmatpush.msra.mxu0 %v164
    %287 = vmatpush.msra.mxu0 %v162
    %288 = vmatmul.f32.gmra.mxu0 %v159
    %v289 = vpop.f32.mrf.mxu0
    %v290 = vadd.f32 %v229, %v289
    %291 = vdwg.mxu0
    %292 = vmatpush.msra.mxu0 %v224
    %293 = vmatpush.msra.mxu0 %v222
    %294 = vmatpush.msra.mxu0 %v220
    %295 = vmatpush.msra.mxu0 %v218
    %296 = vmatpush.msra.mxu0 %v216
    %297 = vmatpush.msra.mxu0 %v214
    %298 = vmatpush.msra.mxu0 %v212
    %299 = vmatpush.msra.mxu0 %v210
    %300 = vmatpush.msra.mxu0 %v208
    %301 = vmatpush.msra.mxu0 %v206
    %302 = vmatpush.msra.mxu0 %v204
    %303 = vmatpush.msra.mxu0 %v202
    %304 = vmatpush.msra.mxu0 %v200
    %305 = vmatpush.msra.mxu0 %v198
    %306 = vmatpush.msra.mxu0 %v196
    %307 = vmatpush.msra.mxu0 %v194
    %308 = vmatmul.f32.gmra.mxu0 %v160
    %v309 = vpop.f32.mrf.mxu0
    %v310 = vadd.f32 %v290, %v309
    %311 = vdwg.mxu0
    %v312 = vmax.f32 %v270, 0.0
    %v313 = vmax.f32 %v310, 0.0
    %v314 = vld [vmem:[#allocation7 + $0x300] sm:$0xff]
    %v315 = vld [vmem:[#allocation7 + $0x308] sm:$0xff]
    %v316 = vld [vmem:[#allocation7 + $0x310] sm:$0xff]
    %v317 = vld [vmem:[#allocation7 + $0x318] sm:$0xff]
    %v318 = vld [vmem:[#allocation7 + $0x320] sm:$0xff]
    %v319 = vld [vmem:[#allocation7 + $0x328] sm:$0xff]
    %v320 = vld [vmem:[#allocation7 + $0x330] sm:$0xff]
    %v321 = vld [vmem:[#allocation7 + $0x338] sm:$0xff]
    %v322 = vld [vmem:[#allocation7 + $0x340] sm:$0xff]
    %v323 = vld [vmem:[#allocation7 + $0x348] sm:$0xff]
    %v324 = vld [vmem:[#allocation7 + $0x350] sm:$0xff]
    %v325 = vld [vmem:[#allocation7 + $0x358] sm:$0xff]
    %v326 = vld [vmem:[#allocation7 + $0x360] sm:$0xff]
    %v327 = vld [vmem:[#allocation7 + $0x368] sm:$0xff]
    %v328 = vld [vmem:[#allocation7 + $0x370] sm:$0xff]
    %v329 = vld [vmem:[#allocation7 + $0x378] sm:$0xff]
    %v330 = vld [vmem:[#allocation7 + $0x380] sm:$0xff]
    %v331 = vld [vmem:[#allocation7 + $0x388] sm:$0xff]
    %v332 = vld [vmem:[#allocation7 + $0x390] sm:$0xff]
    %v333 = vld [vmem:[#allocation7 + $0x398] sm:$0xff]
    %v334 = vld [vmem:[#allocation7 + $0x3a0] sm:$0xff]
    %v335 = vld [vmem:[#allocation7 + $0x3a8] sm:$0xff]
    %v336 = vld [vmem:[#allocation7 + $0x3b0] sm:$0xff]
    %v337 = vld [vmem:[#allocation7 + $0x3b8] sm:$0xff]
    %v338 = vld [vmem:[#allocation7 + $0x3c0] sm:$0xff]
    %v339 = vld [vmem:[#allocation7 + $0x3c8] sm:$0xff]
    %v340 = vld [vmem:[#allocation7 + $0x3d0] sm:$0xff]
    %v341 = vld [vmem:[#allocation7 + $0x3d8] sm:$0xff]
    %v342 = vld [vmem:[#allocation7 + $0x3e0] sm:$0xff]
    %v343 = vld [vmem:[#allocation7 + $0x3e8] sm:$0xff]
    %v344 = vld [vmem:[#allocation7 + $0x3f0] sm:$0xff]
    %v345 = vld [vmem:[#allocation7 + $0x3f8] sm:$0xff]
    %v346 = vld [vmem:[#allocation7 + $0x400] sm:$0xff]
    %v347 = vld [vmem:[#allocation7 + $0x408] sm:$0xff]
    %v348 = vld [vmem:[#allocation7 + $0x410] sm:$0xff]
    %v349 = vld [vmem:[#allocation7 + $0x418] sm:$0xff]
    %v350 = vld [vmem:[#allocation7 + $0x420] sm:$0xff]
    %v351 = vld [vmem:[#allocation7 + $0x428] sm:$0xff]
    %v352 = vld [vmem:[#allocation7 + $0x430] sm:$0xff]
    %v353 = vld [vmem:[#allocation7 + $0x438] sm:$0xff]
    %v354 = vld [vmem:[#allocation7 + $0x440] sm:$0xff]
    %v355 = vld [vmem:[#allocation7 + $0x448] sm:$0xff]
    %v356 = vld [vmem:[#allocation7 + $0x450] sm:$0xff]
    %v357 = vld [vmem:[#allocation7 + $0x458] sm:$0xff]
    %v358 = vld [vmem:[#allocation7 + $0x460] sm:$0xff]
    %v359 = vld [vmem:[#allocation7 + $0x468] sm:$0xff]
    %v360 = vld [vmem:[#allocation7 + $0x470] sm:$0xff]
    %v361 = vld [vmem:[#allocation7 + $0x478] sm:$0xff]
    %v362 = vld [vmem:[#allocation7 + $0x480] sm:$0xff]
    %v363 = vld [vmem:[#allocation7 + $0x488] sm:$0xff]
    %v364 = vld [vmem:[#allocation7 + $0x490] sm:$0xff]
    %v365 = vld [vmem:[#allocation7 + $0x498] sm:$0xff]
    %v366 = vld [vmem:[#allocation7 + $0x4a0] sm:$0xff]
    %v367 = vld [vmem:[#allocation7 + $0x4a8] sm:$0xff]
    %v368 = vld [vmem:[#allocation7 + $0x4b0] sm:$0xff]
    %v369 = vld [vmem:[#allocation7 + $0x4b8] sm:$0xff]
    %v370 = vld [vmem:[#allocation7 + $0x4c0] sm:$0xff]
    %v371 = vld [vmem:[#allocation7 + $0x4c8] sm:$0xff]
    %v372 = vld [vmem:[#allocation7 + $0x4d0] sm:$0xff]
    %v373 = vld [vmem:[#allocation7 + $0x4d8] sm:$0xff]
    %v374 = vld [vmem:[#allocation7 + $0x4e0] sm:$0xff]
    %v375 = vld [vmem:[#allocation7 + $0x4e8] sm:$0xff]
    %v376 = vld [vmem:[#allocation7 + $0x4f0] sm:$0xff]
    %v377 = vld [vmem:[#allocation7 + $0x4f8] sm:$0xff]
    %s378 = scalar_lea.vmem [#allocation8], 2
    %v379 = vld [vmem:[%s378] ss:$8 sm:$0x3]
    %v381 = vperm.slane %v379, 0
    %v382 = vperm.slane %v379, 1
    %385 = vmatpush.msra.mxu0 %v344
    %386 = vmatpush.msra.mxu0 %v342
    %387 = vmatpush.msra.mxu0 %v340
    %388 = vmatpush.msra.mxu0 %v338
    %389 = vmatpush.msra.mxu0 %v336
    %390 = vmatpush.msra.mxu0 %v334
    %391 = vmatpush.msra.mxu0 %v332
    %392 = vmatpush.msra.mxu0 %v330
    %393 = vmatpush.msra.mxu0 %v328
    %394 = vmatpush.msra.mxu0 %v326
    %395 = vmatpush.msra.mxu0 %v324
    %396 = vmatpush.msra.mxu0 %v322
    %397 = vmatpush.msra.mxu0 %v320
    %398 = vmatpush.msra.mxu0 %v318
    %399 = vmatpush.msra.mxu0 %v316
    %400 = vmatpush.msra.mxu0 %v314
    %401 = vmatmul.f32.gmra.mxu0 %v312
    %v402 = vpop.f32.mrf.mxu0
    %v403 = vadd.f32 %v381, %v402
    %404 = vdwg.mxu0
    %405 = vmatpush.msra.mxu0 %v376
    %406 = vmatpush.msra.mxu0 %v374
    %407 = vmatpush.msra.mxu0 %v372
    %408 = vmatpush.msra.mxu0 %v370
    %409 = vmatpush.msra.mxu0 %v368
    %410 = vmatpush.msra.mxu0 %v366
    %411 = vmatpush.msra.mxu0 %v364
    %412 = vmatpush.msra.mxu0 %v362
    %413 = vmatpush.msra.mxu0 %v360
    %414 = vmatpush.msra.mxu0 %v358
    %415 = vmatpush.msra.mxu0 %v356
    %416 = vmatpush.msra.mxu0 %v354
    %417 = vmatpush.msra.mxu0 %v352
    %418 = vmatpush.msra.mxu0 %v350
    %419 = vmatpush.msra.mxu0 %v348
    %420 = vmatpush.msra.mxu0 %v346
    %421 = vmatmul.f32.gmra.mxu0 %v313
    %v422 = vpop.f32.mrf.mxu0
    %v423 = vadd.f32 %v403, %v422
    %424 = vdwg.mxu0
    %425 = vmatpush.msra.mxu0 %v345
    %426 = vmatpush.msra.mxu0 %v343
    %427 = vmatpush.msra.mxu0 %v341
    %428 = vmatpush.msra.mxu0 %v339
    %429 = vmatpush.msra.mxu0 %v337
    %430 = vmatpush.msra.mxu0 %v335
    %431 = vmatpush.msra.mxu0 %v333
    %432 = vmatpush.msra.mxu0 %v331
    %433 = vmatpush.msra.mxu0 %v329
    %434 = vmatpush.msra.mxu0 %v327
    %435 = vmatpush.msra.mxu0 %v325
    %436 = vmatpush.msra.mxu0 %v323
    %437 = vmatpush.msra.mxu0 %v321
    %438 = vmatpush.msra.mxu0 %v319
    %439 = vmatpush.msra.mxu0 %v317
    %440 = vmatpush.msra.mxu0 %v315
    %441 = vmatmul.f32.gmra.mxu0 %v312
    %v442 = vpop.f32.mrf.mxu0
    %v443 = vadd.f32 %v382, %v442
    %444 = vdwg.mxu0
    %445 = vmatpush.msra.mxu0 %v377
    %446 = vmatpush.msra.mxu0 %v375
    %447 = vmatpush.msra.mxu0 %v373
    %448 = vmatpush.msra.mxu0 %v371
    %449 = vmatpush.msra.mxu0 %v369
    %450 = vmatpush.msra.mxu0 %v367
    %451 = vmatpush.msra.mxu0 %v365
    %452 = vmatpush.msra.mxu0 %v363
    %453 = vmatpush.msra.mxu0 %v361
    %454 = vmatpush.msra.mxu0 %v359
    %455 = vmatpush.msra.mxu0 %v357
    %456 = vmatpush.msra.mxu0 %v355
    %457 = vmatpush.msra.mxu0 %v353
    %458 = vmatpush.msra.mxu0 %v351
    %459 = vmatpush.msra.mxu0 %v349
    %460 = vmatpush.msra.mxu0 %v347
    %461 = vmatmul.f32.gmra.mxu0 %v313
    %v462 = vpop.f32.mrf.mxu0
    %v463 = vadd.f32 %v443, %v462
    %464 = vdwg.mxu0
    %v465 = vmul.f32 %v463, 0.5
    %v466 = vmul.f32 %v465, 1.442695
    %v467 = vpow.pop %v466
    %v468 = vmul.f32 %v80, %v467
    %v469 = vadd.f32 %v468, %v423
    %v470 = vld [vmem:[#allocation7 + $0x500] sm:$0xff]
    %v471 = vld [vmem:[#allocation7 + $0x508] sm:$0xff]
    %v472 = vld [vmem:[#allocation7 + $0x510] sm:$0xff]
    %v473 = vld [vmem:[#allocation7 + $0x518] sm:$0xff]
    %v474 = vld [vmem:[#allocation7 + $0x520] sm:$0xff]
    %v475 = vld [vmem:[#allocation7 + $0x528] sm:$0xff]
    %v476 = vld [vmem:[#allocation7 + $0x530] sm:$0xff]
    %v477 = vld [vmem:[#allocation7 + $0x538] sm:$0xff]
    %v478 = vld [vmem:[#allocation7 + $0x540] sm:$0xff]
    %v479 = vld [vmem:[#allocation7 + $0x548] sm:$0xff]
    %v480 = vld [vmem:[#allocation7 + $0x550] sm:$0xff]
    %v481 = vld [vmem:[#allocation7 + $0x558] sm:$0xff]
    %v482 = vld [vmem:[#allocation7 + $0x560] sm:$0xff]
    %v483 = vld [vmem:[#allocation7 + $0x568] sm:$0xff]
    %v484 = vld [vmem:[#allocation7 + $0x570] sm:$0xff]
    %v485 = vld [vmem:[#allocation7 + $0x578] sm:$0xff]
    %v486 = vld [vmem:[#allocation7 + $0x580] sm:$0xff]
    %v487 = vld [vmem:[#allocation7 + $0x588] sm:$0xff]
    %v488 = vld [vmem:[#allocation7 + $0x590] sm:$0xff]
    %v489 = vld [vmem:[#allocation7 + $0x598] sm:$0xff]
    %v490 = vld [vmem:[#allocation7 + $0x5a0] sm:$0xff]
    %v491 = vld [vmem:[#allocation7 + $0x5a8] sm:$0xff]
    %v492 = vld [vmem:[#allocation7 + $0x5b0] sm:$0xff]
    %v493 = vld [vmem:[#allocation7 + $0x5b8] sm:$0xff]
    %v494 = vld [vmem:[#allocation7 + $0x5c0] sm:$0xff]
    %v495 = vld [vmem:[#allocation7 + $0x5c8] sm:$0xff]
    %v496 = vld [vmem:[#allocation7 + $0x5d0] sm:$0xff]
    %v497 = vld [vmem:[#allocation7 + $0x5d8] sm:$0xff]
    %v498 = vld [vmem:[#allocation7 + $0x5e0] sm:$0xff]
    %v499 = vld [vmem:[#allocation7 + $0x5e8] sm:$0xff]
    %v500 = vld [vmem:[#allocation7 + $0x5f0] sm:$0xff]
    %v501 = vld [vmem:[#allocation7 + $0x5f8] sm:$0xff]
    %s502 = scalar_lea.vmem [#allocation8], 3
    %v503 = vld [vmem:[%s502] ss:$8 sm:$0x3]
    %v505 = vperm.slane %v503, 0
    %v506 = vperm.slane %v503, 1
    %509 = vmatpush.msra.mxu0 %v500
    %510 = vmatpush.msra.mxu0 %v498
    %511 = vmatpush.msra.mxu0 %v496
    %512 = vmatpush.msra.mxu0 %v494
    %513 = vmatpush.msra.mxu0 %v492
    %514 = vmatpush.msra.mxu0 %v490
    %515 = vmatpush.msra.mxu0 %v488
    %516 = vmatpush.msra.mxu0 %v486
    %517 = vmatpush.msra.mxu0 %v484
    %518 = vmatpush.msra.mxu0 %v482
    %519 = vmatpush.msra.mxu0 %v480
    %520 = vmatpush.msra.mxu0 %v478
    %521 = vmatpush.msra.mxu0 %v476
    %522 = vmatpush.msra.mxu0 %v474
    %523 = vmatpush.msra.mxu0 %v472
    %524 = vmatpush.msra.mxu0 %v470
    %525 = vmatmul.f32.gmra.mxu0 %v469
    %v526 = vpop.f32.mrf.mxu0
    %v527 = vadd.f32 %v505, %v526
    %528 = vdwg.mxu0
    %529 = vmatpush.msra.mxu0 %v501
    %530 = vmatpush.msra.mxu0 %v499
    %531 = vmatpush.msra.mxu0 %v497
    %532 = vmatpush.msra.mxu0 %v495
    %533 = vmatpush.msra.mxu0 %v493
    %534 = vmatpush.msra.mxu0 %v491
    %535 = vmatpush.msra.mxu0 %v489
    %536 = vmatpush.msra.mxu0 %v487
    %537 = vmatpush.msra.mxu0 %v485
    %538 = vmatpush.msra.mxu0 %v483
    %539 = vmatpush.msra.mxu0 %v481
    %540 = vmatpush.msra.mxu0 %v479
    %541 = vmatpush.msra.mxu0 %v477
    %542 = vmatpush.msra.mxu0 %v475
    %543 = vmatpush.msra.mxu0 %v473
    %544 = vmatpush.msra.mxu0 %v471
    %545 = vmatmul.f32.gmra.mxu0 %v469
    %v546 = vpop.f32.mrf.mxu0
    %v547 = vadd.f32 %v506, %v546
    %548 = vdwg.mxu0
    %v549 = vmax.f32 %v527, 0.0
    %v550 = vmax.f32 %v547, 0.0
    %v551 = vld [vmem:[#allocation7 + $0x600] sm:$0xff]
    %v552 = vld [vmem:[#allocation7 + $0x608] sm:$0xff]
    %v553 = vld [vmem:[#allocation7 + $0x610] sm:$0xff]
    %v554 = vld [vmem:[#allocation7 + $0x618] sm:$0xff]
    %v555 = vld [vmem:[#allocation7 + $0x620] sm:$0xff]
    %v556 = vld [vmem:[#allocation7 + $0x628] sm:$0xff]
    %v557 = vld [vmem:[#allocation7 + $0x630] sm:$0xff]
    %v558 = vld [vmem:[#allocation7 + $0x638] sm:$0xff]
    %v559 = vld [vmem:[#allocation7 + $0x640] sm:$0xff]
    %v560 = vld [vmem:[#allocation7 + $0x648] sm:$0xff]
    %v561 = vld [vmem:[#allocation7 + $0x650] sm:$0xff]
    %v562 = vld [vmem:[#allocation7 + $0x658] sm:$0xff]
    %v563 = vld [vmem:[#allocation7 + $0x660] sm:$0xff]
    %v564 = vld [vmem:[#allocation7 + $0x668] sm:$0xff]
    %v565 = vld [vmem:[#allocation7 + $0x670] sm:$0xff]
    %v566 = vld [vmem:[#allocation7 + $0x678] sm:$0xff]
    %v567 = vld [vmem:[#allocation7 + $0x680] sm:$0xff]
    %v568 = vld [vmem:[#allocation7 + $0x688] sm:$0xff]
    %v569 = vld [vmem:[#allocation7 + $0x690] sm:$0xff]
    %v570 = vld [vmem:[#allocation7 + $0x698] sm:$0xff]
    %v571 = vld [vmem:[#allocation7 + $0x6a0] sm:$0xff]
    %v572 = vld [vmem:[#allocation7 + $0x6a8] sm:$0xff]
    %v573 = vld [vmem:[#allocation7 + $0x6b0] sm:$0xff]
    %v574 = vld [vmem:[#allocation7 + $0x6b8] sm:$0xff]
    %v575 = vld [vmem:[#allocation7 + $0x6c0] sm:$0xff]
    %v576 = vld [vmem:[#allocation7 + $0x6c8] sm:$0xff]
    %v577 = vld [vmem:[#allocation7 + $0x6d0] sm:$0xff]
    %v578 = vld [vmem:[#allocation7 + $0x6d8] sm:$0xff]
    %v579 = vld [vmem:[#allocation7 + $0x6e0] sm:$0xff]
    %v580 = vld [vmem:[#allocation7 + $0x6e8] sm:$0xff]
    %v581 = vld [vmem:[#allocation7 + $0x6f0] sm:$0xff]
    %v582 = vld [vmem:[#allocation7 + $0x6f8] sm:$0xff]
    %v583 = vld [vmem:[#allocation7 + $0x700] sm:$0xff]
    %v584 = vld [vmem:[#allocation7 + $0x708] sm:$0xff]
    %v585 = vld [vmem:[#allocation7 + $0x710] sm:$0xff]
    %v586 = vld [vmem:[#allocation7 + $0x718] sm:$0xff]
    %v587 = vld [vmem:[#allocation7 + $0x720] sm:$0xff]
    %v588 = vld [vmem:[#allocation7 + $0x728] sm:$0xff]
    %v589 = vld [vmem:[#allocation7 + $0x730] sm:$0xff]
    %v590 = vld [vmem:[#allocation7 + $0x738] sm:$0xff]
    %v591 = vld [vmem:[#allocation7 + $0x740] sm:$0xff]
    %v592 = vld [vmem:[#allocation7 + $0x748] sm:$0xff]
    %v593 = vld [vmem:[#allocation7 + $0x750] sm:$0xff]
    %v594 = vld [vmem:[#allocation7 + $0x758] sm:$0xff]
    %v595 = vld [vmem:[#allocation7 + $0x760] sm:$0xff]
    %v596 = vld [vmem:[#allocation7 + $0x768] sm:$0xff]
    %v597 = vld [vmem:[#allocation7 + $0x770] sm:$0xff]
    %v598 = vld [vmem:[#allocation7 + $0x778] sm:$0xff]
    %v599 = vld [vmem:[#allocation7 + $0x780] sm:$0xff]
    %v600 = vld [vmem:[#allocation7 + $0x788] sm:$0xff]
    %v601 = vld [vmem:[#allocation7 + $0x790] sm:$0xff]
    %v602 = vld [vmem:[#allocation7 + $0x798] sm:$0xff]
    %v603 = vld [vmem:[#allocation7 + $0x7a0] sm:$0xff]
    %v604 = vld [vmem:[#allocation7 + $0x7a8] sm:$0xff]
    %v605 = vld [vmem:[#allocation7 + $0x7b0] sm:$0xff]
    %v606 = vld [vmem:[#allocation7 + $0x7b8] sm:$0xff]
    %v607 = vld [vmem:[#allocation7 + $0x7c0] sm:$0xff]
    %v608 = vld [vmem:[#allocation7 + $0x7c8] sm:$0xff]
    %v609 = vld [vmem:[#allocation7 + $0x7d0] sm:$0xff]
    %v610 = vld [vmem:[#allocation7 + $0x7d8] sm:$0xff]
    %v611 = vld [vmem:[#allocation7 + $0x7e0] sm:$0xff]
    %v612 = vld [vmem:[#allocation7 + $0x7e8] sm:$0xff]
    %v613 = vld [vmem:[#allocation7 + $0x7f0] sm:$0xff]
    %v614 = vld [vmem:[#allocation7 + $0x7f8] sm:$0xff]
    %s615 = scalar_lea.vmem [#allocation8], 4
    %v616 = vld [vmem:[%s615] ss:$8 sm:$0x3]
    %v618 = vperm.slane %v616, 0
    %v619 = vperm.slane %v616, 1
    %622 = vmatpush.msra.mxu0 %v581
    %623 = vmatpush.msra.mxu0 %v579
    %624 = vmatpush.msra.mxu0 %v577
    %625 = vmatpush.msra.mxu0 %v575
    %626 = vmatpush.msra.mxu0 %v573
    %627 = vmatpush.msra.mxu0 %v571
    %628 = vmatpush.msra.mxu0 %v569
    %629 = vmatpush.msra.mxu0 %v567
    %630 = vmatpush.msra.mxu0 %v565
    %631 = vmatpush.msra.mxu0 %v563
    %632 = vmatpush.msra.mxu0 %v561
    %633 = vmatpush.msra.mxu0 %v559
    %634 = vmatpush.msra.mxu0 %v557
    %635 = vmatpush.msra.mxu0 %v555
    %636 = vmatpush.msra.mxu0 %v553
    %637 = vmatpush.msra.mxu0 %v551
    %638 = vmatmul.f32.gmra.mxu0 %v549
    %v639 = vpop.f32.mrf.mxu0
    %v640 = vadd.f32 %v618, %v639
    %641 = vdwg.mxu0
    %642 = vmatpush.msra.mxu0 %v613
    %643 = vmatpush.msra.mxu0 %v611
    %644 = vmatpush.msra.mxu0 %v609
    %645 = vmatpush.msra.mxu0 %v607
    %646 = vmatpush.msra.mxu0 %v605
    %647 = vmatpush.msra.mxu0 %v603
    %648 = vmatpush.msra.mxu0 %v601
    %649 = vmatpush.msra.mxu0 %v599
    %650 = vmatpush.msra.mxu0 %v597
    %651 = vmatpush.msra.mxu0 %v595
    %652 = vmatpush.msra.mxu0 %v593
    %653 = vmatpush.msra.mxu0 %v591
    %654 = vmatpush.msra.mxu0 %v589
    %655 = vmatpush.msra.mxu0 %v587
    %656 = vmatpush.msra.mxu0 %v585
    %657 = vmatpush.msra.mxu0 %v583
    %658 = vmatmul.f32.gmra.mxu0 %v550
    %v659 = vpop.f32.mrf.mxu0
    %v660 = vadd.f32 %v640, %v659
    %661 = vdwg.mxu0
    %662 = vmatpush.msra.mxu0 %v582
    %663 = vmatpush.msra.mxu0 %v580
    %664 = vmatpush.msra.mxu0 %v578
    %665 = vmatpush.msra.mxu0 %v576
    %666 = vmatpush.msra.mxu0 %v574
    %667 = vmatpush.msra.mxu0 %v572
    %668 = vmatpush.msra.mxu0 %v570
    %669 = vmatpush.msra.mxu0 %v568
    %670 = vmatpush.msra.mxu0 %v566
    %671 = vmatpush.msra.mxu0 %v564
    %672 = vmatpush.msra.mxu0 %v562
    %673 = vmatpush.msra.mxu0 %v560
    %674 = vmatpush.msra.mxu0 %v558
    %675 = vmatpush.msra.mxu0 %v556
    %676 = vmatpush.msra.mxu0 %v554
    %677 = vmatpush.msra.mxu0 %v552
    %678 = vmatmul.f32.gmra.mxu0 %v549
    %v679 = vpop.f32.mrf.mxu0
    %v680 = vadd.f32 %v619, %v679
    %681 = vdwg.mxu0
    %682 = vmatpush.msra.mxu0 %v614
    %683 = vmatpush.msra.mxu0 %v612
    %684 = vmatpush.msra.mxu0 %v610
    %685 = vmatpush.msra.mxu0 %v608
    %686 = vmatpush.msra.mxu0 %v606
    %687 = vmatpush.msra.mxu0 %v604
    %688 = vmatpush.msra.mxu0 %v602
    %689 = vmatpush.msra.mxu0 %v600
    %690 = vmatpush.msra.mxu0 %v598
    %691 = vmatpush.msra.mxu0 %v596
    %692 = vmatpush.msra.mxu0 %v594
    %693 = vmatpush.msra.mxu0 %v592
    %694 = vmatpush.msra.mxu0 %v590
    %695 = vmatpush.msra.mxu0 %v588
    %696 = vmatpush.msra.mxu0 %v586
    %697 = vmatpush.msra.mxu0 %v584
    %698 = vmatmul.f32.gmra.mxu0 %v550
    %v699 = vpop.f32.mrf.mxu0
    %v700 = vadd.f32 %v680, %v699
    %701 = vdwg.mxu0
    %v702 = vmax.f32 %v660, 0.0
    %v703 = vmax.f32 %v700, 0.0
    %v704 = vld [vmem:[#allocation7 + $0x800] sm:$0xff]
    %v705 = vld [vmem:[#allocation7 + $0x810] sm:$0xff]
    %v706 = vld [vmem:[#allocation7 + $0x820] sm:$0xff]
    %v707 = vld [vmem:[#allocation7 + $0x830] sm:$0xff]
    %v708 = vld [vmem:[#allocation7 + $0x840] sm:$0xff]
    %v709 = vld [vmem:[#allocation7 + $0x850] sm:$0xff]
    %v710 = vld [vmem:[#allocation7 + $0x860] sm:$0xff]
    %v711 = vld [vmem:[#allocation7 + $0x870] sm:$0xff]
    %v712 = vld [vmem:[#allocation7 + $0x880] sm:$0xff]
    %v713 = vld [vmem:[#allocation7 + $0x890] sm:$0xff]
    %v714 = vld [vmem:[#allocation7 + $0x8a0] sm:$0xff]
    %v715 = vld [vmem:[#allocation7 + $0x8b0] sm:$0xff]
    %v716 = vld [vmem:[#allocation7 + $0x8c0] sm:$0xff]
    %v717 = vld [vmem:[#allocation7 + $0x8d0] sm:$0xff]
    %v718 = vld [vmem:[#allocation7 + $0x8e0] sm:$0xff]
    %v719 = vld [vmem:[#allocation7 + $0x8f0] sm:$0xff]
    %v720 = vld [vmem:[#allocation7 + $0x900] sm:$0xff]
    %v721 = vld [vmem:[#allocation7 + $0x910] sm:$0xff]
    %v722 = vld [vmem:[#allocation7 + $0x920] sm:$0xff]
    %v723 = vld [vmem:[#allocation7 + $0x930] sm:$0xff]
    %v724 = vld [vmem:[#allocation7 + $0x940] sm:$0xff]
    %v725 = vld [vmem:[#allocation7 + $0x950] sm:$0xff]
    %v726 = vld [vmem:[#allocation7 + $0x960] sm:$0xff]
    %v727 = vld [vmem:[#allocation7 + $0x970] sm:$0xff]
    %v728 = vld [vmem:[#allocation7 + $0x980] sm:$0xff]
    %v729 = vld [vmem:[#allocation7 + $0x990] sm:$0xff]
    %v730 = vld [vmem:[#allocation7 + $0x9a0] sm:$0xff]
    %v731 = vld [vmem:[#allocation7 + $0x9b0] sm:$0xff]
    %v732 = vld [vmem:[#allocation7 + $0x9c0] sm:$0xff]
    %v733 = vld [vmem:[#allocation7 + $0x9d0] sm:$0xff]
    %v734 = vld [vmem:[#allocation7 + $0x9e0] sm:$0xff]
    %v735 = vld [vmem:[#allocation7 + $0x9f0] sm:$0xff]
    %s736 = scalar_lea.vmem [#allocation8], 5
    %v737 = vld [vmem:[%s736] ss:$8 sm:$0x3]
    %v739 = vperm.slane %v737, 0
    %741 = vmatpush.msra.mxu0 %v719
    %742 = vmatpush.msra.mxu0 %v718
    %743 = vmatpush.msra.mxu0 %v717
    %744 = vmatpush.msra.mxu0 %v716
    %745 = vmatpush.msra.mxu0 %v715
    %746 = vmatpush.msra.mxu0 %v714
    %747 = vmatpush.msra.mxu0 %v713
    %748 = vmatpush.msra.mxu0 %v712
    %749 = vmatpush.msra.mxu0 %v711
    %750 = vmatpush.msra.mxu0 %v710
    %751 = vmatpush.msra.mxu0 %v709
    %752 = vmatpush.msra.mxu0 %v708
    %753 = vmatpush.msra.mxu0 %v707
    %754 = vmatpush.msra.mxu0 %v706
    %755 = vmatpush.msra.mxu0 %v705
    %756 = vmatpush.msra.mxu0 %v704
    %757 = vmatmul.f32.gmra.mxu0 %v702
    %v758 = vpop.f32.mrf.mxu0
    %v759 = vadd.f32 %v739, %v758
    %760 = vdwg.mxu0
    %761 = vmatpush.msra.mxu0 %v735
    %762 = vmatpush.msra.mxu0 %v734
    %763 = vmatpush.msra.mxu0 %v733
    %764 = vmatpush.msra.mxu0 %v732
    %765 = vmatpush.msra.mxu0 %v731
    %766 = vmatpush.msra.mxu0 %v730
    %767 = vmatpush.msra.mxu0 %v729
    %768 = vmatpush.msra.mxu0 %v728
    %769 = vmatpush.msra.mxu0 %v727
    %770 = vmatpush.msra.mxu0 %v726
    %771 = vmatpush.msra.mxu0 %v725
    %772 = vmatpush.msra.mxu0 %v724
    %773 = vmatpush.msra.mxu0 %v723
    %774 = vmatpush.msra.mxu0 %v722
    %775 = vmatpush.msra.mxu0 %v721
    %776 = vmatpush.msra.mxu0 %v720
    %777 = vmatmul.f32.gmra.mxu0 %v703
    %v778 = vpop.f32.mrf.mxu0
    %v779 = vadd.f32 %v759, %v778
    %780 = vdwg.mxu0
    %781 = vst [vmem:[#allocation10] sm:$0xff] %v779
    %782 = vst [vmem:[#allocation10 + $0x8] sm:$0xff] %v423
    %783 = vst [vmem:[#allocation10 + $0x10] sm:$0xff] %v463
    // Predicated region
    $region34: #{tpu_custom_call.1} parent=1 // pred_check
      _
    $region35: #{tpu_custom_call.1} parent=1 // pred_check_branch
      %785 = sbr.rel (0) target = $region37
    $region36: #{tpu_custom_call.1} parent=1 // pred_region
      %787 = vsyncadd [#allocation4], 0
      %s789 = sshll.u32 [#allocation10], 4
      %s790 = int_to_ptr.vmem [resolvable:$true] %s789
      %s791 = sshll.u32 %s4, 4
      %s792 = int_to_ptr.hbm [resolvable:$true] %s791
      %794 = dma.vmem_to_hbm [thread:$0]  %s790, 384, %s792, [#allocation4]
    $region37: #{tpu_custom_call.1} parent=1 // pred_fallthru
      _
    // Predicated region
    $region38: #{tpu_custom_call.1} parent=1 // pred_check
      _
    $region39: #{tpu_custom_call.1} parent=1 // pred_check_branch
      %796 = sbr.rel (0) target = $region41
    $region40: #{tpu_custom_call.1} parent=1 // pred_region
      %798 = dma.done [#allocation4], 384
    $region41: #{tpu_custom_call.1} parent=1 // pred_fallthru
      _
    %799 = vsyncpa [#allocation3], 1
    %800 = vsyncpa [#allocation6], 1
    %801 = vsyncpa [#allocation9], 1
    %802 = vsyncpa [#allocation4], 1

</llo_original>
